<compile_context>
chip_gen: v5e
topology: v5e:2x2
jax: 0.10.0
libtpu: 0.0.40
codegen_flags: <defaults>
</compile_context>

<pallas_src>
import jax
import jax.numpy as jnp
from jax.experimental import pallas as pl
from jax.experimental.pallas import tpu as pltpu


def _round_up(n: int, m: int) -> int:
    return ((n + m - 1) // m) * m


# ----------------------------- Pallas kernel -------------------------------
def _hybrid_kernel(x_ref, rowid_ref, m_ref, b1_ref, w2_ref, sc_ref, o_ref):
    """Multi-hot gather+fc1 (one MXU matmul) -> ReLU -> fc2 -> scaled sigmoid.

    Batch-on-lanes layout: the batch tile TB lives on the lane axis of every
    tensor, so all loads/stores are lane-dense.
    """
    xt = x_ref[...]                           # (3, TB) int32, offsets pre-added
    row_ids = rowid_ref[...]                  # (K_total, 1) int32, loop-invariant

    # Combined multi-hot mask: 3 ones per column (one per embedding segment).
    hot = ((row_ids == xt[0:1, :]) |
           (row_ids == xt[1:2, :]) |
           (row_ids == xt[2:3, :])).astype(jnp.float32)          # (K_total, TB)

    # Fused gather + fc1: single (H, K_total) @ (K_total, TB) MXU matmul.
    h = jnp.dot(m_ref[...], hot,
                preferred_element_type=jnp.float32) + b1_ref[...]  # (H, TB)
    h = jnp.maximum(h, 0.0)                                        # ReLU (VPU)

    # fc2 (output dim 1) on VPU/XLU: broadcast multiply by the w2 column and
    # reduce over H (sublane axis); scalars come from SMEM.
    b2 = sc_ref[0]
    r_lo = sc_ref[1]
    r_hi = sc_ref[2]
    logit = jnp.sum(w2_ref[...] * h, axis=0, keepdims=True) + b2   # (1, TB)

    # Sigmoid scaling into the rating range (EUP + VPU).
    o_ref[...] = jax.nn.sigmoid(logit) * (r_hi - r_lo) + r_lo      # (1, TB)


# ------------------------------- Wrapper ------------------------------------
def nn_hybrid_filtering_forward(params, X, rating_range, *,
                                block_b=None, max_tile=4096):
    """Matches NNHybridFiltering.forward: X is (B, 3) integer indices."""
    user_emb, item_emb, rate_emb = (params["user_emb"], params["item_emb"],
                                    params["rate_emb"])
    w1, b1, w2, b2 = params["w1"], params["b1"], params["w2"], params["b2"]

    B = X.shape[0]
    nu, du = user_emb.shape
    ni, di = item_emb.shape
    nr, dr = rate_emb.shape
    H = w1.shape[1]

    # ---- batch tile: large enough to amortize per-grid-step overhead, but
    # at least 2 tiles when B allows (v7x megacore sharding); capped so v5e's
    # ~16 MiB scoped-VMEM default stays comfortable.
    if block_b is None:
        block_b = max(128, min(max_tile, _round_up(max(-(-B // 2), 1), 128)))
    B_pad = max(_round_up(B, block_b), block_b)
    num_tiles = B_pad // block_b

    # ---- fold fc1 into the embedding tables (one-time wrapper matmuls) -----
    hp = jax.lax.Precision.HIGHEST
    w1t = w1.T.astype(jnp.float32)                                 # (H, D)
    m_u = jnp.dot(w1t[:, :du], user_emb.T.astype(jnp.float32), precision=hp)
    m_i = jnp.dot(w1t[:, du:du + di], item_emb.T.astype(jnp.float32),
                  precision=hp)
    m_r = jnp.dot(w1t[:, du + di:du + di + dr],
                  rate_emb.T.astype(jnp.float32), precision=hp)
    m = jnp.concatenate([m_u, m_i, m_r], axis=1)                   # (H, K_raw)
    k_raw = nu + ni + nr
    k_tot = _round_up(k_raw, 8)
    m = jnp.pad(m, ((0, 0), (0, k_tot - k_raw)))                   # (H, K_tot)

    # Loop-invariant row-id column (resident in VMEM; padded ids never match).
    row_ids = jnp.arange(k_tot, dtype=jnp.int32).reshape(k_tot, 1)

    # ---- index matrix: batch-on-lanes transpose + per-segment row offsets --
    xp = jnp.pad(X.astype(jnp.int32), ((0, B_pad - B), (0, 0)))    # pad rows: idx 0
    off = jnp.array([[0], [nu], [nu + ni]], dtype=jnp.int32)       # (3, 1)
    xt = xp.T + off                                                # (3, B_pad)
    # TODO(synk): out-of-range indices select nothing (zero contribution)
    # instead of raising like nn.Embedding would.

    b1c = b1.reshape(H, 1).astype(jnp.float32)                     # (H, 1)
    w2c = w2.reshape(H, 1).astype(jnp.float32)                     # (H, 1)
    scalars = jnp.concatenate([
        b2.reshape(-1).astype(jnp.float32),
        jnp.asarray(rating_range, dtype=jnp.float32).reshape(-1),
    ])                                                             # (3,) -> SMEM

    resident = lambda i: (0, 0)   # same block every step -> stays in VMEM

    out = pl.pallas_call(
        _hybrid_kernel,
        out_shape=jax.ShapeDtypeStruct((1, B_pad), jnp.float32),
        grid=(num_tiles,),
        in_specs=[
            pl.BlockSpec((3, block_b), lambda i: (0, i)),          # streamed X tile
            pl.BlockSpec(row_ids.shape, resident),                 # row-id column
            pl.BlockSpec(m.shape, resident),                       # folded table
            pl.BlockSpec(b1c.shape, resident),                     # fc1 bias
            pl.BlockSpec(w2c.shape, resident),                     # fc2 weight col
            pl.BlockSpec(memory_space=pltpu.MemorySpace.SMEM),     # [b2, lo, hi]
        ],
        out_specs=pl.BlockSpec((1, block_b), lambda i: (0, i)),    # lane-dense
        compiler_params=pltpu.CompilerParams(
            dimension_semantics=("parallel",)),
    )(xt, row_ids, m, b1c, w2c, scalars)

    # Drop batch padding, return (B, 1) like the PyTorch module.
    return out[0, :B].reshape(B, 1)


# --------------------------- Parameter init ---------------------------------
def init_params(key, n_users, n_isbn, n_bxrating,
                embdim_users, embdim_isbn, embdim_bxrating, n_activations):
    """Deterministic parameter init mirroring the PyTorch module's shapes."""
    ks = jax.random.split(key, 7)
    d_in = embdim_users + embdim_isbn + embdim_bxrating
    # nn.Embedding default init: N(0, 1)
    user_emb = jax.random.normal(ks[0], (n_users, embdim_users), jnp.float32)
    item_emb = jax.random.normal(ks[1], (n_isbn, embdim_isbn), jnp.float32)
    rate_emb = jax.random.normal(ks[2], (n_bxrating, embdim_bxrating),
                                 jnp.float32)
    # nn.Linear default init: U(-1/sqrt(fan_in), 1/sqrt(fan_in))
    lim1 = 1.0 / jnp.sqrt(jnp.float32(d_in))
    w1 = jax.random.uniform(ks[3], (d_in, n_activations), jnp.float32,
                            -lim1, lim1)
    b1 = jax.random.uniform(ks[4], (1, n_activations), jnp.float32,
                            -lim1, lim1)
    lim2 = 1.0 / jnp.sqrt(jnp.float32(n_activations))
    w2 = jax.random.uniform(ks[5], (n_activations, 1), jnp.float32,
                            -lim2, lim2)
    b2 = jax.random.uniform(ks[6], (1, 1), jnp.float32, -lim2, lim2)
    return dict(user_emb=user_emb, item_emb=item_emb, rate_emb=rate_emb,
                w1=w1, b1=b1, w2=w2, b2=b2)


# --------------------------------- Main -------------------------------------
if __name__ == "__main__":
    n_users, n_isbn, n_bxrating = 50, 60, 11
    embdim_users, embdim_isbn, embdim_bxrating = 8, 8, 8
    n_activations = 32
    rating_range = [1.0, 10.0]
    batch = 300   # auto tile -> block_b=256, 2 grid tiles + tail padding

    key = jax.random.PRNGKey(0)
    pkey, xkey = jax.random.split(key)
    params = init_params(pkey, n_users, n_isbn, n_bxrating,
                         embdim_users, embdim_isbn, embdim_bxrating,
                         n_activations)

    ku, ki, kr = jax.random.split(xkey, 3)
    X = jnp.stack([
        jax.random.randint(ku, (batch,), 0, n_users),
        jax.random.randint(ki, (batch,), 0, n_isbn),
        jax.random.randint(kr, (batch,), 0, n_bxrating),
    ], axis=1).astype(jnp.int32)                                   # (B, 3)

    preds = nn_hybrid_filtering_forward(params, X, rating_range)
    preds = jax.block_until_ready(preds)

    # Sanity check against a pure-JAX reference of the PyTorch forward.
    emb = jnp.concatenate([params["user_emb"][X[:, 0]],
                           params["item_emb"][X[:, 1]],
                           params["rate_emb"][X[:, 2]]], axis=1)
    h_ref = jnp.maximum(emb @ params["w1"] + params["b1"], 0.0)
    ref = (jax.nn.sigmoid(h_ref @ params["w2"] + params["b2"])
           * (rating_range[1] - rating_range[0]) + rating_range[0])
    assert preds.shape == (batch, 1)
    assert jnp.allclose(preds, ref, atol=1e-4, rtol=1e-4)

    print("KERNEL_OK")
</pallas_src>

<mosaic_0001>
module attributes {stable_mosaic.version = 11 : i64} {
  func.func @_hybrid_kernel(%arg0: i32, %arg1: memref<3x256xi32, #tpu.memory_space<vmem>>, %arg2: memref<128x1xi32, #tpu.memory_space<vmem>>, %arg3: memref<32x128xf32, #tpu.memory_space<vmem>>, %arg4: memref<32x1xf32, #tpu.memory_space<vmem>>, %arg5: memref<32x1xf32, #tpu.memory_space<vmem>>, %arg6: memref<3xf32, #tpu.memory_space<smem>>, %arg7: memref<1x256xf32, #tpu.memory_space<vmem>>) attributes {dimension_semantics = [#tpu.dimension_semantics<parallel>], iteration_bounds = array<i64: 2>, scalar_prefetch = 0 : i64, scratch_operands = 0 : i64, tpu.core_type = #tpu.core_type<tc>, window_params = [{transform_indices = @transform_0, window_bounds = array<i64: 3, 256>}, {pipeline_mode = #tpu.pipeline_mode<synchronous>, transform_indices = @transform_1, window_bounds = array<i64: 128, 1>}, {pipeline_mode = #tpu.pipeline_mode<synchronous>, transform_indices = @transform_2, window_bounds = array<i64: 32, 128>}, {pipeline_mode = #tpu.pipeline_mode<synchronous>, transform_indices = @transform_3, window_bounds = array<i64: 32, 1>}, {pipeline_mode = #tpu.pipeline_mode<synchronous>, transform_indices = @transform_4, window_bounds = array<i64: 32, 1>}, {transform_indices = @transform_5, window_bounds = array<i64: 3>}, {transform_indices = @transform_6, window_bounds = array<i64: 1, 256>}]} {
    %c0 = arith.constant 0 : index
    %c0_0 = arith.constant 0 : index
    %0 = vector.load %arg1[%c0, %c0_0] : memref<3x256xi32, #tpu.memory_space<vmem>>, vector<3x256xi32>
    %c0_1 = arith.constant 0 : index
    %c0_2 = arith.constant 0 : index
    %1 = vector.load %arg2[%c0_1, %c0_2] : memref<128x1xi32, #tpu.memory_space<vmem>>, vector<128x1xi32>
    %2 = vector.extract_strided_slice %0 {offsets = [0, 0], sizes = [1, 256], strides = [1, 1]} : vector<3x256xi32> to vector<1x256xi32>
    %3 = vector.broadcast %1 : vector<128x1xi32> to vector<128x256xi32>
    %4 = vector.broadcast %2 : vector<1x256xi32> to vector<128x256xi32>
    %5 = arith.cmpi eq, %3, %4 : vector<128x256xi32>
    %6 = vector.extract_strided_slice %0 {offsets = [1, 0], sizes = [1, 256], strides = [1, 1]} : vector<3x256xi32> to vector<1x256xi32>
    %7 = vector.broadcast %1 : vector<128x1xi32> to vector<128x256xi32>
    %8 = vector.broadcast %6 : vector<1x256xi32> to vector<128x256xi32>
    %9 = arith.cmpi eq, %7, %8 : vector<128x256xi32>
    %10 = arith.ori %5, %9 : vector<128x256xi1>
    %11 = vector.extract_strided_slice %0 {offsets = [2, 0], sizes = [1, 256], strides = [1, 1]} : vector<3x256xi32> to vector<1x256xi32>
    %12 = vector.broadcast %1 : vector<128x1xi32> to vector<128x256xi32>
    %13 = vector.broadcast %11 : vector<1x256xi32> to vector<128x256xi32>
    %14 = arith.cmpi eq, %12, %13 : vector<128x256xi32>
    %15 = arith.ori %10, %14 : vector<128x256xi1>
    %16 = arith.extui %15 : vector<128x256xi1> to vector<128x256xi32>
    %17 = arith.sitofp %16 : vector<128x256xi32> to vector<128x256xf32>
    %c0_3 = arith.constant 0 : index
    %c0_4 = arith.constant 0 : index
    %18 = vector.load %arg3[%c0_3, %c0_4] : memref<32x128xf32, #tpu.memory_space<vmem>>, vector<32x128xf32>
    %cst = arith.constant dense<0.000000e+00> : vector<32x256xf32>
    %19 = tpu.matmul %18, %17, %cst {dimension_numbers = #tpu.dot_dimension_numbers<[1], [0], [0], [1], [0, 0, 1, 1], [], []>} : vector<32x128xf32>, vector<128x256xf32>, vector<32x256xf32> -> vector<32x256xf32>
    %c0_5 = arith.constant 0 : index
    %c0_6 = arith.constant 0 : index
    %20 = vector.load %arg4[%c0_5, %c0_6] : memref<32x1xf32, #tpu.memory_space<vmem>>, vector<32x1xf32>
    %21 = vector.broadcast %20 : vector<32x1xf32> to vector<32x256xf32>
    %22 = arith.addf %19, %21 : vector<32x256xf32>
    %cst_7 = arith.constant 0.000000e+00 : f32
    %23 = vector.broadcast %cst_7 : f32 to vector<32x256xf32>
    %24 = arith.maximumf %22, %23 : vector<32x256xf32>
    %c0_8 = arith.constant 0 : index
    %25 = memref.load %arg6[%c0_8] : memref<3xf32, #tpu.memory_space<smem>>
    %c1 = arith.constant 1 : index
    %26 = memref.load %arg6[%c1] : memref<3xf32, #tpu.memory_space<smem>>
    %c2 = arith.constant 2 : index
    %27 = memref.load %arg6[%c2] : memref<3xf32, #tpu.memory_space<smem>>
    %c0_9 = arith.constant 0 : index
    %c0_10 = arith.constant 0 : index
    %28 = vector.load %arg5[%c0_9, %c0_10] : memref<32x1xf32, #tpu.memory_space<vmem>>, vector<32x1xf32>
    %29 = vector.broadcast %28 : vector<32x1xf32> to vector<32x256xf32>
    %30 = arith.mulf %29, %24 : vector<32x256xf32>
    %cst_11 = arith.constant dense<0.000000e+00> : vector<256xf32>
    %31 = vector.multi_reduction <add>, %30, %cst_11 [0] : vector<32x256xf32> to vector<256xf32>
    %32 = vector.shape_cast %31 : vector<256xf32> to vector<1x256xf32>
    %33 = vector.broadcast %25 : f32 to vector<1x256xf32>
    %34 = arith.addf %32, %33 : vector<1x256xf32>
    %35 = arith.negf %34 : vector<1x256xf32>
    %36 = math.exp %35 : vector<1x256xf32>
    %cst_12 = arith.constant 1.000000e+00 : f32
    %37 = vector.broadcast %cst_12 : f32 to vector<1x256xf32>
    %38 = arith.addf %37, %36 : vector<1x256xf32>
    %39 = arith.divf %37, %38 : vector<1x256xf32>
    %40 = arith.subf %27, %26 : f32
    %41 = vector.broadcast %40 : f32 to vector<1x256xf32>
    %42 = arith.mulf %39, %41 : vector<1x256xf32>
    %43 = vector.broadcast %26 : f32 to vector<1x256xf32>
    %44 = arith.addf %42, %43 : vector<1x256xf32>
    %c0_13 = arith.constant 0 : index
    %c0_14 = arith.constant 0 : index
    %45 = vector.load %arg7[%c0_13, %c0_14] : memref<1x256xf32, #tpu.memory_space<vmem>>, vector<1x256xf32>
    tpu.vector_store %arg7[%c0_13, %c0_14], %44 {strides = array<i32>} : memref<1x256xf32, #tpu.memory_space<vmem>>, vector<1x256xf32>,
    return
  }
  func.func @transform_0(%arg0: i32) -> (i32, i32) {
    %c0_i32 = arith.constant 0 : i32
    %c0_i32_0 = arith.constant 0 : i32
    return %c0_i32, %arg0 : i32, i32
  }
  func.func @transform_1(%arg0: i32) -> (i32, i32) {
    %c0_i32 = arith.constant 0 : i32
    %c0_i32_0 = arith.constant 0 : i32
    %c0_i32_1 = arith.constant 0 : i32
    return %c0_i32, %c0_i32_0 : i32, i32
  }
  func.func @transform_2(%arg0: i32) -> (i32, i32) {
    %c0_i32 = arith.constant 0 : i32
    %c0_i32_0 = arith.constant 0 : i32
    %c0_i32_1 = arith.constant 0 : i32
    return %c0_i32, %c0_i32_0 : i32, i32
  }
  func.func @transform_3(%arg0: i32) -> (i32, i32) {
    %c0_i32 = arith.constant 0 : i32
    %c0_i32_0 = arith.constant 0 : i32
    %c0_i32_1 = arith.constant 0 : i32
    return %c0_i32, %c0_i32_0 : i32, i32
  }
  func.func @transform_4(%arg0: i32) -> (i32, i32) {
    %c0_i32 = arith.constant 0 : i32
    %c0_i32_0 = arith.constant 0 : i32
    %c0_i32_1 = arith.constant 0 : i32
    return %c0_i32, %c0_i32_0 : i32, i32
  }
  func.func @transform_5(%arg0: i32) -> i32 {
    %c0_i32 = arith.constant 0 : i32
    %c0_i32_0 = arith.constant 0 : i32
    return %c0_i32 : i32
  }
  func.func @transform_6(%arg0: i32) -> (i32, i32) {
    %c0_i32 = arith.constant 0 : i32
    %c0_i32_0 = arith.constant 0 : i32
    return %c0_i32, %arg0 : i32, i32
  }
}

</mosaic_0001>

<llo_original>
// kernel: tpu_custom_call.1
$region0: #{tpu_custom_call.1}
  #allocation0 [shape = 'u32[]', space=smem, size = 0x4, offset = 0x4, fixed_abs, tag = 'smem constant byte address 0x4 - core index']
  #allocation1 [shape = 'u32[72,128]{1,0:T(1,128)}', space=vmem, size = 0x9000, scoped, tag = 'internal scratch']
  %s0 = inlined_call_operand.vmem [shape: s32[3,512], index: 0, kind: input, shape index: {}]
  %s1 = inlined_call_operand.vmem [shape: s32[128,1], index: 1, kind: input, shape index: {}]
  %s2 = inlined_call_operand.vmem [shape: f32[32,128], index: 2, kind: input, shape index: {}]
  %s3 = inlined_call_operand.vmem [shape: f32[32,1], index: 3, kind: input, shape index: {}]
  %s4 = inlined_call_operand.vmem [shape: f32[32,1], index: 4, kind: input, shape index: {}]
  %s5 = inlined_call_operand.vmem [shape: f32[3], index: 5, kind: input, shape index: {}]
  %s6 = inlined_call_operand.hbm [shape: f32[1,512], index: 6, kind: output, shape index: {}]
  %s7 = sld [smem:[#allocation0]]
  $region61: #{tpu_custom_call.1} parent=0
    _
  %s9 = ssub.s32 1, %s7
  %s10 = scalar_select 0, %s9, %s7
  $region1: #{tpu_custom_call.1} parent=0
    #allocation2 [shape = 'u8[512]{0}', space=smem, size = 0x200, scoped, tag = 'input window, operand 5, single buffered']
    #allocation3 [shape = 's32[2]{0}', space=sflag, size = 0x8, scoped, tag = 'scoped memory for tpu_custom_call.1']
    #allocation4 [shape = 's32[2]{0}', space=sflag, size = 0x8, scoped, tag = 'scoped memory for tpu_custom_call.1']
    #allocation5 [shape = 'u8[2048]{0}', space=vmem, size = 0x800, scoped, tag = 'output window, operand 0']
    %11 = vsyncpa [#allocation4], 0
    %12 = vsyncpa [#allocation3], 0
    %s13 = scalar_lea.sflag [#allocation3], 1
    %14 = vsyncpa %s13, 0
    loop: start=0, step=1, limit=4
    $region2: #{tpu_custom_call.1} parent=1 // loop_pre_header
      _
    $region3: #{tpu_custom_call.1} parent=1 // loop_header
      %s16 = sphi 0, %s20
      %p17 = scmp.ge.s32.totalorder %s16, 4
      %s26 = sphi 0, %s28
      %s29 = sphi 0, %s26
      %s30 = sphi 0, %s29
      %s46 = sphi 0, %s30
      %s50 = sphi 0, %s50
      %s52 = sphi 0, %s50
      %s53 = sphi 0, %s52
      %s67 = sphi 0, %s53
      %s71 = sphi 0, %s71
      %s73 = sphi 0, %s71
      %s74 = sphi 0, %s73
      %s88 = sphi 0, %s74
      %s92 = sphi 0, %s92
      %s94 = sphi 0, %s92
      %s95 = sphi 0, %s94
      %s109 = sphi 0, %s95
      %s113 = sphi 0, %s113
      %s115 = sphi 0, %s113
      %s116 = sphi 0, %s115
      %s130 = sphi 0, %s116
      %s134 = sphi 0, %s134
      %s136 = sphi 0, %s134
      %s137 = sphi 0, %s136
      %s151 = sphi 0, %s137
      %s157 = sphi 0, %s159
      %s160 = sphi 0, %s157
      %s161 = sphi 0, %s160
      %s177 = sphi 0, %s161
    $region4: #{tpu_custom_call.1} parent=1 // loop_header_branch
      %19 = sbr.rel (%p17) target = $region8
    $region5: #{tpu_custom_call.1} parent=1 // loop_body
      %s21 = ssub.s32 %s16, 1
      %s22 = ssub.s32 %s16, 2
      %s23 = sadd.s32 %s16, 1
      %s24 = ssub.s32 %s16, %s23
      %p25 = scmp.eq.s32.totalorder %s24, 0
      %s27 = sadd.s32 %s26, 1
      %s28 = scalar_select %p25, %s26, %s27
      %p31 = pneg %p25
      %p32 = scmp.eq.s32.totalorder %s16, 1
      %p33 = por %p31, %p32
      %p34 = scmp.ne.s32.totalorder %s26, %s29
      %p35 = scmp.eq.s32.totalorder %s16, 0
      %p36 = por %p34, %p35
      %p37 = scmp.ne.s32.totalorder %s26, %s29
      %p38 = scmp.eq.s32.totalorder %s21, 1
      %p39 = por %p37, %p38
      %p40 = scmp.ne.s32.totalorder %s29, %s30
      %p41 = scmp.eq.s32.totalorder %s21, 0
      %p42 = por %p40, %p41
      %p43 = scmp.ne.s32.totalorder %s29, %s30
      %p44 = scmp.eq.s32.totalorder %s22, 1
      %p45 = por %p43, %p44
      %p47 = scmp.ne.s32.totalorder %s30, %s46
      %p48 = scmp.eq.s32.totalorder %s22, 0
      %p49 = por %p47, %p48
      %s51 = sadd.s32 %s50, 1
      %p54 = scmp.eq.s32.totalorder %s16, 1
      %p55 = scmp.ne.s32.totalorder %s50, %s52
      %p56 = scmp.eq.s32.totalorder %s16, 0
      %p57 = por %p55, %p56
      %p58 = scmp.ne.s32.totalorder %s50, %s52
      %p59 = scmp.eq.s32.totalorder %s21, 1
      %p60 = por %p58, %p59
      %p61 = scmp.ne.s32.totalorder %s52, %s53
      %p62 = scmp.eq.s32.totalorder %s21, 0
      %p63 = por %p61, %p62
      %p64 = scmp.ne.s32.totalorder %s52, %s53
      %p65 = scmp.eq.s32.totalorder %s22, 1
      %p66 = por %p64, %p65
      %p68 = scmp.ne.s32.totalorder %s53, %s67
      %p69 = scmp.eq.s32.totalorder %s22, 0
      %p70 = por %p68, %p69
      %s72 = sadd.s32 %s71, 1
      %p75 = scmp.eq.s32.totalorder %s16, 1
      %p76 = scmp.ne.s32.totalorder %s71, %s73
      %p77 = scmp.eq.s32.totalorder %s16, 0
      %p78 = por %p76, %p77
      %p79 = scmp.ne.s32.totalorder %s71, %s73
      %p80 = scmp.eq.s32.totalorder %s21, 1
      %p81 = por %p79, %p80
      %p82 = scmp.ne.s32.totalorder %s73, %s74
      %p83 = scmp.eq.s32.totalorder %s21, 0
      %p84 = por %p82, %p83
      %p85 = scmp.ne.s32.totalorder %s73, %s74
      %p86 = scmp.eq.s32.totalorder %s22, 1
      %p87 = por %p85, %p86
      %p89 = scmp.ne.s32.totalorder %s74, %s88
      %p90 = scmp.eq.s32.totalorder %s22, 0
      %p91 = por %p89, %p90
      %s93 = sadd.s32 %s92, 1
      %p96 = scmp.eq.s32.totalorder %s16, 1
      %p97 = scmp.ne.s32.totalorder %s92, %s94
      %p98 = scmp.eq.s32.totalorder %s16, 0
      %p99 = por %p97, %p98
      %p100 = scmp.ne.s32.totalorder %s92, %s94
      %p101 = scmp.eq.s32.totalorder %s21, 1
      %p102 = por %p100, %p101
      %p103 = scmp.ne.s32.totalorder %s94, %s95
      %p104 = scmp.eq.s32.totalorder %s21, 0
      %p105 = por %p103, %p104
      %p106 = scmp.ne.s32.totalorder %s94, %s95
      %p107 = scmp.eq.s32.totalorder %s22, 1
      %p108 = por %p106, %p107
      %p110 = scmp.ne.s32.totalorder %s95, %s109
      %p111 = scmp.eq.s32.totalorder %s22, 0
      %p112 = por %p110, %p111
      %s114 = sadd.s32 %s113, 1
      %p117 = scmp.eq.s32.totalorder %s16, 1
      %p118 = scmp.ne.s32.totalorder %s113, %s115
      %p119 = scmp.eq.s32.totalorder %s16, 0
      %p120 = por %p118, %p119
      %p121 = scmp.ne.s32.totalorder %s113, %s115
      %p122 = scmp.eq.s32.totalorder %s21, 1
      %p123 = por %p121, %p122
      %p124 = scmp.ne.s32.totalorder %s115, %s116
      %p125 = scmp.eq.s32.totalorder %s21, 0
      %p126 = por %p124, %p125
      %p127 = scmp.ne.s32.totalorder %s115, %s116
      %p128 = scmp.eq.s32.totalorder %s22, 1
      %p129 = por %p127, %p128
      %p131 = scmp.ne.s32.totalorder %s116, %s130
      %p132 = scmp.eq.s32.totalorder %s22, 0
      %p133 = por %p131, %p132
      %s135 = sadd.s32 %s134, 1
      %p138 = scmp.eq.s32.totalorder %s16, 1
      %p139 = scmp.ne.s32.totalorder %s134, %s136
      %p140 = scmp.eq.s32.totalorder %s16, 0
      %p141 = por %p139, %p140
      %p142 = scmp.ne.s32.totalorder %s134, %s136
      %p143 = scmp.eq.s32.totalorder %s21, 1
      %p144 = por %p142, %p143
      %p145 = scmp.ne.s32.totalorder %s136, %s137
      %p146 = scmp.eq.s32.totalorder %s21, 0
      %p147 = por %p145, %p146
      %p148 = scmp.ne.s32.totalorder %s136, %s137
      %p149 = scmp.eq.s32.totalorder %s22, 1
      %p150 = por %p148, %p149
      %p152 = scmp.ne.s32.totalorder %s137, %s151
      %p153 = scmp.eq.s32.totalorder %s22, 0
      %p154 = por %p152, %p153
      %s155 = ssub.s32 %s16, %s23
      %p156 = scmp.eq.s32.totalorder %s155, 0
      %s158 = sadd.s32 %s157, 1
      %s159 = scalar_select %p156, %s157, %s158
      %p162 = pneg %p156
      %p163 = scmp.eq.s32.totalorder %s16, 1
      %p164 = por %p162, %p163
      %p165 = scmp.ne.s32.totalorder %s157, %s160
      %p166 = scmp.eq.s32.totalorder %s16, 0
      %p167 = por %p165, %p166
      %p168 = scmp.ne.s32.totalorder %s157, %s160
      %p169 = scmp.eq.s32.totalorder %s21, 1
      %p170 = por %p168, %p169
      %p171 = scmp.ne.s32.totalorder %s160, %s161
      %p172 = scmp.eq.s32.totalorder %s21, 0
      %p173 = por %p171, %p172
      %p174 = scmp.ne.s32.totalorder %s160, %s161
      %p175 = scmp.eq.s32.totalorder %s22, 1
      %p176 = por %p174, %p175
      %p178 = scmp.ne.s32.totalorder %s161, %s177
      %p179 = scmp.eq.s32.totalorder %s22, 0
      %p180 = por %p178, %p179
      %p181 = scmp.le.s32.totalorder 1, %s16
      %p182 = scmp.lt.s32.totalorder %s16, 3
      %p183 = pnand %p181, %p182
      %p184 = pneg %p183
      // Predicated region
      $region9: #{tpu_custom_call.1} parent=5 // pred_check
        _
      $region10: #{tpu_custom_call.1} parent=5 // pred_check_branch
        %186 = sbr.rel (%p183) target = $region12
      $region11: #{tpu_custom_call.1} parent=5 // pred_region
        %s187 = ssub.s32 %s16, 1
        // Predicated region
        $region13: #{tpu_custom_call.1} parent=11 // pred_check
          %p188 = pneg %p63
        $region14: #{tpu_custom_call.1} parent=11 // pred_check_branch
          %190 = sbr.rel (%p188) target = $region16
        $region15: #{tpu_custom_call.1} parent=11 // pred_region
          _
        $region16: #{tpu_custom_call.1} parent=11 // pred_fallthru
          _
        // Predicated region
        $region17: #{tpu_custom_call.1} parent=11 // pred_check
          %p191 = pneg %p84
        $region18: #{tpu_custom_call.1} parent=11 // pred_check_branch
          %193 = sbr.rel (%p191) target = $region20
        $region19: #{tpu_custom_call.1} parent=11 // pred_region
          _
        $region20: #{tpu_custom_call.1} parent=11 // pred_fallthru
          _
        // Predicated region
        $region21: #{tpu_custom_call.1} parent=11 // pred_check
          %p194 = pneg %p105
        $region22: #{tpu_custom_call.1} parent=11 // pred_check_branch
          %196 = sbr.rel (%p194) target = $region24
        $region23: #{tpu_custom_call.1} parent=11 // pred_region
          _
        $region24: #{tpu_custom_call.1} parent=11 // pred_fallthru
          _
        // Predicated region
        $region25: #{tpu_custom_call.1} parent=11 // pred_check
          %p197 = pneg %p126
        $region26: #{tpu_custom_call.1} parent=11 // pred_check_branch
          %199 = sbr.rel (%p197) target = $region28
        $region27: #{tpu_custom_call.1} parent=11 // pred_region
          _
        $region28: #{tpu_custom_call.1} parent=11 // pred_fallthru
          _
        // Predicated region
        $region29: #{tpu_custom_call.1} parent=11 // pred_check
          %p200 = pneg %p147
        $region30: #{tpu_custom_call.1} parent=11 // pred_check_branch
          %202 = sbr.rel (%p200) target = $region32
        $region31: #{tpu_custom_call.1} parent=11 // pred_region
          %204 = vsyncadd [#allocation4], 0
          %s206 = sshll.u32 %s5, 4
          %s207 = int_to_ptr.vmem [resolvable:$true] %s206
          %209 = dma.vmem_to_smem %s207, 16, [#allocation2], [#allocation4]
        $region32: #{tpu_custom_call.1} parent=11 // pred_fallthru
          _
      $region12: #{tpu_custom_call.1} parent=5 // pred_fallthru
        _
      %p210 = scmp.lt.s32.totalorder %s16, 2
      // Predicated region
      $region33: #{tpu_custom_call.1} parent=5 // pred_check
        %p211 = pneg %p210
      $region34: #{tpu_custom_call.1} parent=5 // pred_check_branch
        %213 = sbr.rel (%p211) target = $region36
      $region35: #{tpu_custom_call.1} parent=5 // pred_region
        // Predicated region
        $region37: #{tpu_custom_call.1} parent=35 // pred_check
          %p214 = pneg %p36
        $region38: #{tpu_custom_call.1} parent=35 // pred_check_branch
          %216 = sbr.rel (%p214) target = $region40
        $region39: #{tpu_custom_call.1} parent=35 // pred_region
          %s217 = smul.u32 2, %s16
          %p218 = scmp.lt.s32.totalorder %s217, 3
          %s219 = scalar_select %p218, %s217, 3
          %s220 = smul.addr %s219, 4
          %s221 = scalar_lea.vmem %s0, %s220
          %s222 = smul.u32 2, %s16
        $region40: #{tpu_custom_call.1} parent=35 // pred_fallthru
          _
      $region36: #{tpu_custom_call.1} parent=5 // pred_fallthru
        _
      %p223 = scmp.le.s32.totalorder 1, %s16
      %p224 = scmp.lt.s32.totalorder %s16, 3
      %p225 = pnand %p223, %p224
      %p226 = pneg %p225
      // Predicated region
      $region41: #{tpu_custom_call.1} parent=5 // pred_check
        _
      $region42: #{tpu_custom_call.1} parent=5 // pred_check_branch
        %228 = sbr.rel (%p225) target = $region44
      $region43: #{tpu_custom_call.1} parent=5 // pred_region
        %s229 = ssub.s32 %s16, 1
        // Predicated region
        $region45: #{tpu_custom_call.1} parent=43 // pred_check
          %p230 = pneg %p147
        $region46: #{tpu_custom_call.1} parent=43 // pred_check_branch
          %232 = sbr.rel (%p230) target = $region48
        $region47: #{tpu_custom_call.1} parent=43 // pred_region
          %234 = dma.done [#allocation4], 16
        $region48: #{tpu_custom_call.1} parent=43 // pred_fallthru
          _
        %235 = sfence
        %s236 = smul.u32 2, %s21
        %p237 = scmp.lt.s32.totalorder %s236, 3
        %s238 = scalar_select %p237, %s236, 3
        %s239 = smul.addr %s238, 4
        %s240 = scalar_lea.vmem %s0, %s239
        %p241 = pneg %p42
        %p242 = pneg %p39
        %p243 = pneg %p63
        %p244 = pneg %p60
        %p245 = pneg %p84
        %p246 = pneg %p81
        %p247 = pneg %p105
        %p248 = pneg %p102
        %p249 = pneg %p126
        %p250 = pneg %p123
        %p251 = pneg %p147
        %p252 = pneg %p144
        %p253 = pneg %p173
        %p254 = pneg %p170
        %s255 = sand.u32 %s160, 1
        %s256 = scalar_lea.sflag [#allocation3], %s255
        %s257 = sand.u32 %s160, 1
        %s258 = smul.addr %s257, 2
        %s259 = scalar_lea.vmem [#allocation5], %s258
        %s260 = smul.u32 2, %s21
        %p261 = scmp.lt.s32.totalorder %s260, 3
        %s262 = scalar_select %p261, %s260, 3
        %s263 = smul.addr %s262, 4
        %s264 = scalar_lea.vmem %s0, %s263
        %s265 = smul.u32 2, %s21
        %s266 = smul.u32 2, %s21
        %v267 = vld [vmem:[%s264] sm:$0x77]
        %v268 = vld [vmem:[%s1] sm:$0xff]
        %v269 = vld [vmem:[%s1 + $0x8] sm:$0xff]
        %v270 = vld [vmem:[%s1 + $0x10] sm:$0xff]
        %v271 = vld [vmem:[%s1 + $0x18] sm:$0xff]
        %v272 = vld [vmem:[%s1 + $0x20] sm:$0xff]
        %v273 = vld [vmem:[%s1 + $0x28] sm:$0xff]
        %v274 = vld [vmem:[%s1 + $0x30] sm:$0xff]
        %v275 = vld [vmem:[%s1 + $0x38] sm:$0xff]
        %v276 = vld [vmem:[%s1 + $0x40] sm:$0xff]
        %v277 = vld [vmem:[%s1 + $0x48] sm:$0xff]
        %v278 = vld [vmem:[%s1 + $0x50] sm:$0xff]
        %v279 = vld [vmem:[%s1 + $0x58] sm:$0xff]
        %v280 = vld [vmem:[%s1 + $0x60] sm:$0xff]
        %v281 = vld [vmem:[%s1 + $0x68] sm:$0xff]
        %v282 = vld [vmem:[%s1 + $0x70] sm:$0xff]
        %v283 = vld [vmem:[%s1 + $0x78] sm:$0xff]
        %284 = vset.pattern.permute.xlu0 0
        %285 = vperm.xlu0 %284, %v268
        %v286 = vpop.permute.xlu0 %285
        %287 = vset.pattern.permute.xlu0 0
        %288 = vperm.xlu0 %287, %v269
        %v289 = vpop.permute.xlu0 %288
        %290 = vset.pattern.permute.xlu0 0
        %291 = vperm.xlu0 %290, %v270
        %v292 = vpop.permute.xlu0 %291
        %293 = vset.pattern.permute.xlu0 0
        %294 = vperm.xlu0 %293, %v271
        %v295 = vpop.permute.xlu0 %294
        %296 = vset.pattern.permute.xlu0 0
        %297 = vperm.xlu0 %296, %v272
        %v298 = vpop.permute.xlu0 %297
        %299 = vset.pattern.permute.xlu0 0
        %300 = vperm.xlu0 %299, %v273
        %v301 = vpop.permute.xlu0 %300
        %302 = vset.pattern.permute.xlu0 0
        %303 = vperm.xlu0 %302, %v274
        %v304 = vpop.permute.xlu0 %303
        %305 = vset.pattern.permute.xlu0 0
        %306 = vperm.xlu0 %305, %v275
        %v307 = vpop.permute.xlu0 %306
        %308 = vset.pattern.permute.xlu0 0
        %309 = vperm.xlu0 %308, %v276
        %v310 = vpop.permute.xlu0 %309
        %311 = vset.pattern.permute.xlu0 0
        %312 = vperm.xlu0 %311, %v277
        %v313 = vpop.permute.xlu0 %312
        %314 = vset.pattern.permute.xlu0 0
        %315 = vperm.xlu0 %314, %v278
        %v316 = vpop.permute.xlu0 %315
        %317 = vset.pattern.permute.xlu0 0
        %318 = vperm.xlu0 %317, %v279
        %v319 = vpop.permute.xlu0 %318
        %320 = vset.pattern.permute.xlu0 0
        %321 = vperm.xlu0 %320, %v280
        %v322 = vpop.permute.xlu0 %321
        %323 = vset.pattern.permute.xlu0 0
        %324 = vperm.xlu0 %323, %v281
        %v325 = vpop.permute.xlu0 %324
        %326 = vset.pattern.permute.xlu0 0
        %327 = vperm.xlu0 %326, %v282
        %v328 = vpop.permute.xlu0 %327
        %329 = vset.pattern.permute.xlu0 0
        %330 = vperm.xlu0 %329, %v283
        %v331 = vpop.permute.xlu0 %330
        %v332 = vperm.slane %v267, 0
        %v333 = vperm.slane %v267, 4
        %v334 = vperm.slane %v332, 0
        %v335 = vperm.slane %v333, 0
        %vm336 = vcmp.eq.s32.totalorder %v286, %v334
        %vm337 = vcmp.eq.s32.totalorder %v286, %v335
        %vm338 = vcmp.eq.s32.totalorder %v289, %v334
        %vm339 = vcmp.eq.s32.totalorder %v289, %v335
        %vm340 = vcmp.eq.s32.totalorder %v292, %v334
        %vm341 = vcmp.eq.s32.totalorder %v292, %v335
        %vm342 = vcmp.eq.s32.totalorder %v295, %v334
        %vm343 = vcmp.eq.s32.totalorder %v295, %v335
        %vm344 = vcmp.eq.s32.totalorder %v298, %v334
        %vm345 = vcmp.eq.s32.totalorder %v298, %v335
        %vm346 = vcmp.eq.s32.totalorder %v301, %v334
        %vm347 = vcmp.eq.s32.totalorder %v301, %v335
        %vm348 = vcmp.eq.s32.totalorder %v304, %v334
        %vm349 = vcmp.eq.s32.totalorder %v304, %v335
        %vm350 = vcmp.eq.s32.totalorder %v307, %v334
        %vm351 = vcmp.eq.s32.totalorder %v307, %v335
        %vm352 = vcmp.eq.s32.totalorder %v310, %v334
        %vm353 = vcmp.eq.s32.totalorder %v310, %v335
        %vm354 = vcmp.eq.s32.totalorder %v313, %v334
        %vm355 = vcmp.eq.s32.totalorder %v313, %v335
        %vm356 = vcmp.eq.s32.totalorder %v316, %v334
        %vm357 = vcmp.eq.s32.totalorder %v316, %v335
        %vm358 = vcmp.eq.s32.totalorder %v319, %v334
        %vm359 = vcmp.eq.s32.totalorder %v319, %v335
        %vm360 = vcmp.eq.s32.totalorder %v322, %v334
        %vm361 = vcmp.eq.s32.totalorder %v322, %v335
        %vm362 = vcmp.eq.s32.totalorder %v325, %v334
        %vm363 = vcmp.eq.s32.totalorder %v325, %v335
        %vm364 = vcmp.eq.s32.totalorder %v328, %v334
        %vm365 = vcmp.eq.s32.totalorder %v328, %v335
        %vm366 = vcmp.eq.s32.totalorder %v331, %v334
        %vm367 = vcmp.eq.s32.totalorder %v331, %v335
        %v368 = vperm.slane %v267, 1
        %v369 = vperm.slane %v267, 5
        %v370 = vperm.slane %v368, 1
        %v371 = vperm.slane %v369, 1
        %vm372 = vcmp.eq.s32.totalorder %v286, %v370
        %vm373 = vcmp.eq.s32.totalorder %v286, %v371
        %vm374 = vcmp.eq.s32.totalorder %v289, %v370
        %vm375 = vcmp.eq.s32.totalorder %v289, %v371
        %vm376 = vcmp.eq.s32.totalorder %v292, %v370
        %vm377 = vcmp.eq.s32.totalorder %v292, %v371
        %vm378 = vcmp.eq.s32.totalorder %v295, %v370
        %vm379 = vcmp.eq.s32.totalorder %v295, %v371
        %vm380 = vcmp.eq.s32.totalorder %v298, %v370
        %vm381 = vcmp.eq.s32.totalorder %v298, %v371
        %vm382 = vcmp.eq.s32.totalorder %v301, %v370
        %vm383 = vcmp.eq.s32.totalorder %v301, %v371
        %vm384 = vcmp.eq.s32.totalorder %v304, %v370
        %vm385 = vcmp.eq.s32.totalorder %v304, %v371
        %vm386 = vcmp.eq.s32.totalorder %v307, %v370
        %vm387 = vcmp.eq.s32.totalorder %v307, %v371
        %vm388 = vcmp.eq.s32.totalorder %v310, %v370
        %vm389 = vcmp.eq.s32.totalorder %v310, %v371
        %vm390 = vcmp.eq.s32.totalorder %v313, %v370
        %vm391 = vcmp.eq.s32.totalorder %v313, %v371
        %vm392 = vcmp.eq.s32.totalorder %v316, %v370
        %vm393 = vcmp.eq.s32.totalorder %v316, %v371
        %vm394 = vcmp.eq.s32.totalorder %v319, %v370
        %vm395 = vcmp.eq.s32.totalorder %v319, %v371
        %vm396 = vcmp.eq.s32.totalorder %v322, %v370
        %vm397 = vcmp.eq.s32.totalorder %v322, %v371
        %vm398 = vcmp.eq.s32.totalorder %v325, %v370
        %vm399 = vcmp.eq.s32.totalorder %v325, %v371
        %vm400 = vcmp.eq.s32.totalorder %v328, %v370
        %vm401 = vcmp.eq.s32.totalorder %v328, %v371
        %vm402 = vcmp.eq.s32.totalorder %v331, %v370
        %vm403 = vcmp.eq.s32.totalorder %v331, %v371
        %vm404 = vmor %vm336, %vm372
        %vm405 = vmor %vm337, %vm373
        %vm406 = vmor %vm338, %vm374
        %vm407 = vmor %vm339, %vm375
        %vm408 = vmor %vm340, %vm376
        %vm409 = vmor %vm341, %vm377
        %vm410 = vmor %vm342, %vm378
        %vm411 = vmor %vm343, %vm379
        %vm412 = vmor %vm344, %vm380
        %vm413 = vmor %vm345, %vm381
        %vm414 = vmor %vm346, %vm382
        %vm415 = vmor %vm347, %vm383
        %vm416 = vmor %vm348, %vm384
        %vm417 = vmor %vm349, %vm385
        %vm418 = vmor %vm350, %vm386
        %vm419 = vmor %vm351, %vm387
        %vm420 = vmor %vm352, %vm388
        %vm421 = vmor %vm353, %vm389
        %vm422 = vmor %vm354, %vm390
        %vm423 = vmor %vm355, %vm391
        %vm424 = vmor %vm356, %vm392
        %vm425 = vmor %vm357, %vm393
        %vm426 = vmor %vm358, %vm394
        %vm427 = vmor %vm359, %vm395
        %vm428 = vmor %vm360, %vm396
        %vm429 = vmor %vm361, %vm397
        %vm430 = vmor %vm362, %vm398
        %vm431 = vmor %vm363, %vm399
        %vm432 = vmor %vm364, %vm400
        %vm433 = vmor %vm365, %vm401
        %vm434 = vmor %vm366, %vm402
        %vm435 = vmor %vm367, %vm403
        %v436 = vperm.slane %v267, 2
        %v437 = vperm.slane %v267, 6
        %v438 = vperm.slane %v436, 2
        %v439 = vperm.slane %v437, 2
        %vm440 = vcmp.eq.s32.totalorder %v286, %v438
        %vm441 = vcmp.eq.s32.totalorder %v286, %v439
        %vm442 = vcmp.eq.s32.totalorder %v289, %v438
        %vm443 = vcmp.eq.s32.totalorder %v289, %v439
        %vm444 = vcmp.eq.s32.totalorder %v292, %v438
        %vm445 = vcmp.eq.s32.totalorder %v292, %v439
        %vm446 = vcmp.eq.s32.totalorder %v295, %v438
        %vm447 = vcmp.eq.s32.totalorder %v295, %v439
        %vm448 = vcmp.eq.s32.totalorder %v298, %v438
        %vm449 = vcmp.eq.s32.totalorder %v298, %v439
        %vm450 = vcmp.eq.s32.totalorder %v301, %v438
        %vm451 = vcmp.eq.s32.totalorder %v301, %v439
        %vm452 = vcmp.eq.s32.totalorder %v304, %v438
        %vm453 = vcmp.eq.s32.totalorder %v304, %v439
        %vm454 = vcmp.eq.s32.totalorder %v307, %v438
        %vm455 = vcmp.eq.s32.totalorder %v307, %v439
        %vm456 = vcmp.eq.s32.totalorder %v310, %v438
        %vm457 = vcmp.eq.s32.totalorder %v310, %v439
        %vm458 = vcmp.eq.s32.totalorder %v313, %v438
        %vm459 = vcmp.eq.s32.totalorder %v313, %v439
        %vm460 = vcmp.eq.s32.totalorder %v316, %v438
        %vm461 = vcmp.eq.s32.totalorder %v316, %v439
        %vm462 = vcmp.eq.s32.totalorder %v319, %v438
        %vm463 = vcmp.eq.s32.totalorder %v319, %v439
        %vm464 = vcmp.eq.s32.totalorder %v322, %v438
        %vm465 = vcmp.eq.s32.totalorder %v322, %v439
        %vm466 = vcmp.eq.s32.totalorder %v325, %v438
        %vm467 = vcmp.eq.s32.totalorder %v325, %v439
        %vm468 = vcmp.eq.s32.totalorder %v328, %v438
        %vm469 = vcmp.eq.s32.totalorder %v328, %v439
        %vm470 = vcmp.eq.s32.totalorder %v331, %v438
        %vm471 = vcmp.eq.s32.totalorder %v331, %v439
        %vm472 = vmor %vm404, %vm440
        %vm473 = vmor %vm405, %vm441
        %vm474 = vmor %vm406, %vm442
        %vm475 = vmor %vm407, %vm443
        %vm476 = vmor %vm408, %vm444
        %vm477 = vmor %vm409, %vm445
        %vm478 = vmor %vm410, %vm446
        %vm479 = vmor %vm411, %vm447
        %vm480 = vmor %vm412, %vm448
        %vm481 = vmor %vm413, %vm449
        %vm482 = vmor %vm414, %vm450
        %vm483 = vmor %vm415, %vm451
        %vm484 = vmor %vm416, %vm452
        %vm485 = vmor %vm417, %vm453
        %vm486 = vmor %vm418, %vm454
        %vm487 = vmor %vm419, %vm455
        %vm488 = vmor %vm420, %vm456
        %vm489 = vmor %vm421, %vm457
        %vm490 = vmor %vm422, %vm458
        %vm491 = vmor %vm423, %vm459
        %vm492 = vmor %vm424, %vm460
        %vm493 = vmor %vm425, %vm461
        %vm494 = vmor %vm426, %vm462
        %vm495 = vmor %vm427, %vm463
        %vm496 = vmor %vm428, %vm464
        %vm497 = vmor %vm429, %vm465
        %vm498 = vmor %vm430, %vm466
        %vm499 = vmor %vm431, %vm467
        %vm500 = vmor %vm432, %vm468
        %vm501 = vmor %vm433, %vm469
        %vm502 = vmor %vm434, %vm470
        %vm503 = vmor %vm435, %vm471
        %v504 = vsel %vm472, 1, 0
        %v505 = vsel %vm473, 1, 0
        %v506 = vsel %vm474, 1, 0
        %v507 = vsel %vm475, 1, 0
        %v508 = vsel %vm476, 1, 0
        %v509 = vsel %vm477, 1, 0
        %v510 = vsel %vm478, 1, 0
        %v511 = vsel %vm479, 1, 0
        %v512 = vsel %vm480, 1, 0
        %v513 = vsel %vm481, 1, 0
        %v514 = vsel %vm482, 1, 0
        %v515 = vsel %vm483, 1, 0
        %v516 = vsel %vm484, 1, 0
        %v517 = vsel %vm485, 1, 0
        %v518 = vsel %vm486, 1, 0
        %v519 = vsel %vm487, 1, 0
        %v520 = vsel %vm488, 1, 0
        %v521 = vsel %vm489, 1, 0
        %v522 = vsel %vm490, 1, 0
        %v523 = vsel %vm491, 1, 0
        %v524 = vsel %vm492, 1, 0
        %v525 = vsel %vm493, 1, 0
        %v526 = vsel %vm494, 1, 0
        %v527 = vsel %vm495, 1, 0
        %v528 = vsel %vm496, 1, 0
        %v529 = vsel %vm497, 1, 0
        %v530 = vsel %vm498, 1, 0
        %v531 = vsel %vm499, 1, 0
        %v532 = vsel %vm500, 1, 0
        %v533 = vsel %vm501, 1, 0
        %v534 = vsel %vm502, 1, 0
        %v535 = vsel %vm503, 1, 0
        %v536 = vcvt.s32.f32 %v504
        %v537 = vcvt.s32.f32 %v505
        %v538 = vcvt.s32.f32 %v506
        %v539 = vcvt.s32.f32 %v507
        %v540 = vcvt.s32.f32 %v508
        %v541 = vcvt.s32.f32 %v509
        %v542 = vcvt.s32.f32 %v510
        %v543 = vcvt.s32.f32 %v511
        %v544 = vcvt.s32.f32 %v512
        %v545 = vcvt.s32.f32 %v513
        %v546 = vcvt.s32.f32 %v514
        %v547 = vcvt.s32.f32 %v515
        %v548 = vcvt.s32.f32 %v516
        %v549 = vcvt.s32.f32 %v517
        %v550 = vcvt.s32.f32 %v518
        %v551 = vcvt.s32.f32 %v519
        %v552 = vcvt.s32.f32 %v520
        %v553 = vcvt.s32.f32 %v521
        %v554 = vcvt.s32.f32 %v522
        %v555 = vcvt.s32.f32 %v523
        %v556 = vcvt.s32.f32 %v524
        %v557 = vcvt.s32.f32 %v525
        %v558 = vcvt.s32.f32 %v526
        %v559 = vcvt.s32.f32 %v527
        %v560 = vcvt.s32.f32 %v528
        %v561 = vcvt.s32.f32 %v529
        %v562 = vcvt.s32.f32 %v530
        %v563 = vcvt.s32.f32 %v531
        %v564 = vcvt.s32.f32 %v532
        %v565 = vcvt.s32.f32 %v533
        %v566 = vcvt.s32.f32 %v534
        %v567 = vcvt.s32.f32 %v535
        %v568 = vld [vmem:[%s2] sm:$0xff]
        %v569 = vld [vmem:[%s2 + $0x8] sm:$0xff]
        %v570 = vld [vmem:[%s2 + $0x10] sm:$0xff]
        %v571 = vld [vmem:[%s2 + $0x18] sm:$0xff]
        %v572 = vld [vmem:[%s3] sm:$0xff]
        %v573 = vld [vmem:[%s3 + $0x8] sm:$0xff]
        %v574 = vld [vmem:[%s3 + $0x10] sm:$0xff]
        %v575 = vld [vmem:[%s3 + $0x18] sm:$0xff]
        %577 = vset.pattern.permute.xlu0 0
        %578 = vperm.xlu0 %577, %v572
        %v579 = vpop.permute.xlu0 %578
        %582 = vset.pattern.permute.xlu0 0
        %583 = vperm.xlu0 %582, %v573
        %v584 = vpop.permute.xlu0 %583
        %587 = vset.pattern.permute.xlu0 0
        %588 = vperm.xlu0 %587, %v574
        %v589 = vpop.permute.xlu0 %588
        %592 = vset.pattern.permute.xlu0 0
        %593 = vperm.xlu0 %592, %v575
        %v594 = vpop.permute.xlu0 %593
        %596 = vmatpush.msra.mxu0 %v566
        %597 = vmatpush.msra.mxu0 %v564
        %598 = vmatpush.msra.mxu0 %v562
        %599 = vmatpush.msra.mxu0 %v560
        %600 = vmatpush.msra.mxu0 %v558
        %601 = vmatpush.msra.mxu0 %v556
        %602 = vmatpush.msra.mxu0 %v554
        %603 = vmatpush.msra.mxu0 %v552
        %604 = vmatpush.msra.mxu0 %v550
        %605 = vmatpush.msra.mxu0 %v548
        %606 = vmatpush.msra.mxu0 %v546
        %607 = vmatpush.msra.mxu0 %v544
        %608 = vmatpush.msra.mxu0 %v542
        %609 = vmatpush.msra.mxu0 %v540
        %610 = vmatpush.msra.mxu0 %v538
        %611 = vmatpush.msra.mxu0 %v536
        %612 = vmatmul.f32.gmra.mxu0 %v568
        %v613 = vpop.f32.mrf.mxu0
        %v614 = vadd.f32 %v579, %v613
        %615 = vmatmul.f32.gmra.mxu0 %v569
        %v616 = vpop.f32.mrf.mxu0
        %v617 = vadd.f32 %v584, %v616
        %618 = vmatmul.f32.gmra.mxu0 %v570
        %v619 = vpop.f32.mrf.mxu0
        %v620 = vadd.f32 %v589, %v619
        %621 = vmatmul.f32.gmra.mxu0 %v571
        %v622 = vpop.f32.mrf.mxu0
        %v623 = vadd.f32 %v594, %v622
        %624 = vdwg.mxu0
        %625 = vmatpush.msra.mxu0 %v567
        %626 = vmatpush.msra.mxu0 %v565
        %627 = vmatpush.msra.mxu0 %v563
        %628 = vmatpush.msra.mxu0 %v561
        %629 = vmatpush.msra.mxu0 %v559
        %630 = vmatpush.msra.mxu0 %v557
        %631 = vmatpush.msra.mxu0 %v555
        %632 = vmatpush.msra.mxu0 %v553
        %633 = vmatpush.msra.mxu0 %v551
        %634 = vmatpush.msra.mxu0 %v549
        %635 = vmatpush.msra.mxu0 %v547
        %636 = vmatpush.msra.mxu0 %v545
        %637 = vmatpush.msra.mxu0 %v543
        %638 = vmatpush.msra.mxu0 %v541
        %639 = vmatpush.msra.mxu0 %v539
        %640 = vmatpush.msra.mxu0 %v537
        %641 = vmatmul.f32.gmra.mxu0 %v568
        %v642 = vpop.f32.mrf.mxu0
        %v643 = vadd.f32 %v579, %v642
        %644 = vmatmul.f32.gmra.mxu0 %v569
        %v645 = vpop.f32.mrf.mxu0
        %v646 = vadd.f32 %v584, %v645
        %647 = vmatmul.f32.gmra.mxu0 %v570
        %v648 = vpop.f32.mrf.mxu0
        %v649 = vadd.f32 %v589, %v648
        %650 = vmatmul.f32.gmra.mxu0 %v571
        %v651 = vpop.f32.mrf.mxu0
        %v652 = vadd.f32 %v594, %v651
        %653 = vdwg.mxu0
        %v654 = vmax.f32 %v614, 0.0
        %v655 = vmax.f32 %v643, 0.0
        %v656 = vmax.f32 %v617, 0.0
        %v657 = vmax.f32 %v646, 0.0
        %v658 = vmax.f32 %v620, 0.0
        %v659 = vmax.f32 %v649, 0.0
        %v660 = vmax.f32 %v623, 0.0
        %v661 = vmax.f32 %v652, 0.0
        %s662 = sld [smem:[#allocation2]]
        %s663 = sld [smem:[#allocation2 + $0x1]]
        %s664 = sld [smem:[#allocation2 + $0x2]]
        %v665 = vld [vmem:[%s4] sm:$0xff]
        %v666 = vld [vmem:[%s4 + $0x8] sm:$0xff]
        %v667 = vld [vmem:[%s4 + $0x10] sm:$0xff]
        %v668 = vld [vmem:[%s4 + $0x18] sm:$0xff]
        %670 = vset.pattern.permute.xlu0 0
        %671 = vperm.xlu0 %670, %v665
        %v672 = vpop.permute.xlu0 %671
        %675 = vset.pattern.permute.xlu0 0
        %676 = vperm.xlu0 %675, %v666
        %v677 = vpop.permute.xlu0 %676
        %680 = vset.pattern.permute.xlu0 0
        %681 = vperm.xlu0 %680, %v667
        %v682 = vpop.permute.xlu0 %681
        %685 = vset.pattern.permute.xlu0 0
        %686 = vperm.xlu0 %685, %v668
        %v687 = vpop.permute.xlu0 %686
        %v689 = vmul.f32 %v672, %v654
        %v690 = vmul.f32 %v672, %v655
        %v691 = vmul.f32 %v677, %v656
        %v692 = vmul.f32 %v677, %v657
        %v693 = vmul.f32 %v682, %v658
        %v694 = vmul.f32 %v682, %v659
        %v695 = vmul.f32 %v687, %v660
        %v696 = vmul.f32 %v687, %v661
        %v697 = vadd.f32 %v689, %v691
        %v698 = vadd.f32 %v697, %v693
        %v699 = vadd.f32 %v698, %v695
        %v700 = vrot.slane %v699, 4
        %v701 = vadd.f32 %v699, %v700
        %v702 = vrot.slane %v701, 2
        %v703 = vadd.f32 %v701, %v702
        %v704 = vrot.slane %v703, 1
        %v705 = vadd.f32 %v703, %v704
        %v706 = vadd.f32 %v690, %v692
        %v707 = vadd.f32 %v706, %v694
        %v708 = vadd.f32 %v707, %v696
        %v709 = vrot.slane %v708, 4
        %v710 = vadd.f32 %v708, %v709
        %v711 = vrot.slane %v710, 2
        %v712 = vadd.f32 %v710, %v711
        %v713 = vrot.slane %v712, 1
        %v714 = vadd.f32 %v712, %v713
        %v715 = vstv %s662
        %v716 = vadd.f32 %v705, %v715
        %v717 = vadd.f32 %v714, %v715
        %v718 = vxor.u32 %v716, 2147483648
        %v719 = vxor.u32 %v717, 2147483648
        %v720 = vmul.f32 %v718, 1.442695
        %v721 = vpow.pop %v720
        %v722 = vmul.f32 %v719, 1.442695
        %v723 = vpow.pop %v722
        %v724 = vadd.f32 %v721, 1.0
        %v725 = vadd.f32 %v723, 1.0
        %v726 = vrcp.pop %v724
        %v727 = vmul.f32 %v724, %v726
        %v728 = vsub.f32 1.0, %v727
        %v729 = vmul.f32 %v726, %v728
        %v730 = vadd.f32 %v726, %v729
        %vm731 = vweird.f32 %v724
        %vm732 = vweird.f32 %v726
        %vm733 = vmor %vm731, %vm732
        %v734 = vsel %vm733, %v726, %v730
        %v735 = vand.u32 2147483647, %v724
        %vm736 = vcmp.eq.f32.partialorder %v735, 8.507059e+37
        %v737 = vand.u32 %v724, 2147483648
        %v738 = vor.u32 1.1754944e-38, %v737
        %v739 = vsel %vm736, %v738, %v734
        %v740 = vmul.f32 1.0, %v739
        %v741 = vrcp.pop %v725
        %v742 = vmul.f32 %v725, %v741
        %v743 = vsub.f32 1.0, %v742
        %v744 = vmul.f32 %v741, %v743
        %v745 = vadd.f32 %v741, %v744
        %vm746 = vweird.f32 %v725
        %vm747 = vweird.f32 %v741
        %vm748 = vmor %vm746, %vm747
        %v749 = vsel %vm748, %v741, %v745
        %v750 = vand.u32 2147483647, %v725
        %vm751 = vcmp.eq.f32.partialorder %v750, 8.507059e+37
        %v752 = vand.u32 %v725, 2147483648
        %v753 = vor.u32 1.1754944e-38, %v752
        %v754 = vsel %vm751, %v753, %v749
        %v755 = vmul.f32 1.0, %v754
        %s756 = ssub.f32 %s664, %s663
        %v757 = vstv %s756
        %v758 = vmul.f32 %v740, %v757
        %v759 = vmul.f32 %v755, %v757
        %v760 = vstv %s663
        %v761 = vadd.f32 %v758, %v760
        %v762 = vadd.f32 %v759, %v760
        %v765 = vrot.slane %v762, 7
        %vm766 = vcmask 1040384
        %v767 = vsel %vm766, %v761, %v765
        %v769 = vlaneseq
        %vm770 = vcmp.ge.s32.totalorder %v769, 0
        %vm771 = vcmp.lt.s32.totalorder %v769, 256
        %vm772 = vmand %vm770, %vm771
        %773 = vst.msk [vmem:[%s259] sm:$0x3] %vm772, %v767
        %s774 = sand.u32 %s160, 1
        %s775 = scalar_lea.sflag [#allocation3], %s774
        %s776 = sand.u32 %s160, 1
        %s777 = smul.addr %s776, 2
        %s778 = scalar_lea.vmem [#allocation5], %s777
        // Predicated region
        $region49: #{tpu_custom_call.1} parent=43 // pred_check
          %p779 = pneg %p170
        $region50: #{tpu_custom_call.1} parent=43 // pred_check_branch
          %781 = sbr.rel (%p779) target = $region52
        $region51: #{tpu_custom_call.1} parent=43 // pred_region
          %s782 = smul.u32 2, %s21
          %784 = vsyncadd %s775, 0
          %s785 = scalar_lea.hbm %s6, %s782
          %s787 = sshll.u32 %s778, 4
          %s788 = int_to_ptr.vmem [resolvable:$true] %s787
          %s789 = sshll.u32 %s785, 4
          %s790 = int_to_ptr.hbm [resolvable:$true] %s789
          %792 = dma.vmem_to_hbm [thread:$0]  %s788, 32, %s790, %s775
        $region52: #{tpu_custom_call.1} parent=43 // pred_fallthru
          _
      $region44: #{tpu_custom_call.1} parent=5 // pred_fallthru
        _
      %p793 = scmp.le.s32.totalorder 2, %s16
      // Predicated region
      $region53: #{tpu_custom_call.1} parent=5 // pred_check
        %p794 = pneg %p793
      $region54: #{tpu_custom_call.1} parent=5 // pred_check_branch
        %796 = sbr.rel (%p794) target = $region56
      $region55: #{tpu_custom_call.1} parent=5 // pred_region
        %s797 = ssub.s32 %s16, 2
        // Predicated region
        $region57: #{tpu_custom_call.1} parent=55 // pred_check
          %p798 = pneg %p176
        $region58: #{tpu_custom_call.1} parent=55 // pred_check_branch
          %800 = sbr.rel (%p798) target = $region60
        $region59: #{tpu_custom_call.1} parent=55 // pred_region
          %s801 = sand.u32 %s161, 1
          %s802 = scalar_lea.sflag [#allocation3], %s801
          %s803 = sand.u32 %s161, 1
          %s804 = smul.addr %s803, 2
          %s805 = scalar_lea.vmem [#allocation5], %s804
          %807 = dma.done %s802, 32
        $region60: #{tpu_custom_call.1} parent=55 // pred_fallthru
          _
      $region56: #{tpu_custom_call.1} parent=5 // pred_fallthru
        _
    $region6: #{tpu_custom_call.1} parent=1 // loop_footer
      %s20 = sadd.s32 1, %s16
    $region7: #{tpu_custom_call.1} parent=1 // loop_footer_branch
      %15 = sbr.rel target = $region3
    $region8: #{tpu_custom_call.1} parent=1 // loop_exit
      _
    %808 = vsyncpa [#allocation3], 1
    %s809 = scalar_lea.sflag [#allocation3], 1
    %810 = vsyncpa %s809, 1
    %811 = vsyncpa [#allocation4], 1
    %s812 = scalar_lea.sflag [#allocation4], 1
    %813 = vsyncpa %s812, 1

</llo_original>
